<compile_context>
chip_gen: v6e
topology: v6e:2x2x1
jax: 0.10.0
libtpu: 0.0.40
codegen_flags: <defaults>
</compile_context>

<pallas_src>
import functools

import jax
import jax.numpy as jnp
from jax.experimental import pallas as pl
from jax.experimental.pallas import tpu as pltpu

_LANES = 128


def _focal_loss_kernel(logits_ref, targets_ref, alpha_ref, out_ref, acc_ref, *,
                       gamma, n_total, tile_n, tiles_per_core):
    c = pl.program_id(0)              # TensorCore split (parallel axis)
    i = pl.program_id(1)              # batch-tile sweep (arbitrary / reduction axis)
    n_inner = pl.num_programs(1)

    @pl.when(i == 0)
    def _init():
        acc_ref[...] = jnp.zeros_like(acc_ref)

    x = logits_ref[...].astype(jnp.float32)       # (TILE_N, C)
    t = targets_ref[...]                          # (TILE_N, 1) int32
    a = alpha_ref[...].astype(jnp.float32)        # (1, C)

    # Numerically stable log-sum-exp over the class (lane) axis.
    m = jnp.max(x, axis=-1, keepdims=True)                              # (TILE_N, 1)
    lse = jnp.log(jnp.sum(jnp.exp(x - m), axis=-1, keepdims=True))      # (TILE_N, 1)

    # One-hot select of the target class (no dynamic gather on TPU vregs).
    cls_idx = jax.lax.broadcasted_iota(jnp.int32, x.shape, 1)           # (TILE_N, C)
    onehot = cls_idx == t                                               # (TILE_N, C) bool
    x_t = jnp.sum(jnp.where(onehot, x, 0.0), axis=-1, keepdims=True)    # (TILE_N, 1)
    alpha_t = jnp.sum(jnp.where(onehot, a, 0.0), axis=-1, keepdims=True)

    # ce = -log_softmax(x)[target] = (m + lse) - x[target]; no (N, C) logp temp.
    ce = (m + lse) - x_t
    pt = jnp.exp(-ce)
    w = jnp.maximum(1.0 - pt, 0.0)    # clamp: pt can round slightly above 1

    # Focal weighting: small integer gamma -> repeated multiply (VPU), else pow (EUP).
    g = float(gamma)
    if g == int(g) and 1 <= int(g) <= 8:
        wg = w
        for _ in range(int(g) - 1):
            wg = wg * w
    elif g == 0.0:
        wg = jnp.ones_like(w)
    else:
        wg = w ** g

    focal = alpha_t * (wg * ce)                                          # (TILE_N, 1)

    # Logical rows covered by this grid step (before the phantom-block clamp applied in
    # the index_map). Full tiles skip the mask entirely; partial / phantom tiles mask.
    tile_start = (c * tiles_per_core + i) * tile_n
    is_full = tile_start + tile_n <= n_total

    @pl.when(is_full)
    def _accumulate_full():
        acc_ref[...] = acc_ref[...] + jnp.sum(focal)

    @pl.when(jnp.logical_not(is_full))
    def _accumulate_masked():
        row = jax.lax.broadcasted_iota(jnp.int32, focal.shape, 0)
        valid = (tile_start + row) < n_total
        acc_ref[...] = acc_ref[...] + jnp.sum(jnp.where(valid, focal, 0.0))

    @pl.when(i == n_inner - 1)
    def _finalize():
        out_ref[...] = acc_ref[...]   # per-core partial sum (lane-broadcast)


def _vmem_budget_bytes():
    """Scoped-VMEM budget derived from the chip generation (v7x: 64 MiB per core)."""
    try:
        cap = int(pltpu.get_tpu_info().vmem_capacity_bytes)
    except Exception:
        cap = 64 * 1024 * 1024        # conservative fallback: v7x per-core VMEM
    return max(16 * 1024 * 1024, min(cap - 16 * 1024 * 1024, 100 * 1024 * 1024))


def _num_tensorcores():
    """Best-effort TensorCore count per device (2 on v7x / megacore parts, else 1)."""
    try:
        n = getattr(jax.devices()[0], "num_cores", None)
        if n:
            return max(1, min(int(n), 2))
    except Exception:
        pass
    return 1


def _choose_tile_n(n, c, itemsize, vmem_budget):
    """Largest batch tile whose pipeline buffers + in-kernel f32 temporaries fit VMEM."""
    cpad = -(-c // _LANES) * _LANES   # classes are lane-padded to 128 in VMEM
    per_row = (2 * cpad * itemsize    # logits tile, double-buffered
               + 2 * _LANES * 4       # (tile_n, 1) int32 targets, double-buffered, lane-padded
               + 4 * cpad * 4         # f32 upcast / exp(x - m) / one-hot select temporaries
               + 6 * _LANES * 4)      # (tile_n, 1) f32 column temporaries (m, lse, ce, ...)
    slack = 2 * 1024 * 1024           # alpha, accumulator, compiler-internal scratch
    tile = max(8, (vmem_budget - slack) // per_row)
    if tile >= n:
        return n                      # single full-extent block (always layout-legal)
    tile -= tile % 8                  # sublane constraint for partial blocks
    return max(8, tile)


def focal_loss(logits, targets, alpha=None, gamma=2.0, tile_n=None, num_cores=None):
    """logits: (N, C) float32/bfloat16, targets: (N,) int, alpha: (C,) float or None.

    Returns the scalar mean focal loss, matching the PyTorch FocalLoss module.
    Note: no ignore_index handling (the module does not use one).
    """
    n, c = logits.shape
    targets2d = targets.astype(jnp.int32).reshape(n, 1)
    if alpha is None:
        alpha = jnp.ones((c,), jnp.float32)
    alpha2d = jnp.asarray(alpha, jnp.float32).reshape(1, c)

    itemsize = jnp.dtype(logits.dtype).itemsize     # bf16 logits stay bf16 in HBM
    vmem_budget = _vmem_budget_bytes()
    if tile_n is None:
        tile_n = _choose_tile_n(n, c, itemsize, vmem_budget)
    if num_cores is None:
        num_cores = _num_tensorcores()

    n_tiles = pl.cdiv(n, tile_n)
    num_cores = max(1, min(num_cores, n_tiles))      # never more cores than tiles
    tiles_per_core = pl.cdiv(n_tiles, num_cores)

    def row_block(cc, ii):
        # Clamp phantom blocks (when n_tiles is not a multiple of num_cores) into range;
        # the kernel masks them out via the *unclamped* logical row offset.
        return (jnp.minimum(cc * tiles_per_core + ii, n_tiles - 1), 0)

    kernel = functools.partial(_focal_loss_kernel, gamma=float(gamma), n_total=n,
                               tile_n=tile_n, tiles_per_core=tiles_per_core)

    cost = pl.CostEstimate(
        flops=8 * n * c,
        transcendentals=n * c + 2 * n,
        bytes_accessed=n * c * itemsize + n * 4 + c * 4 + num_cores * _LANES * 4,
    )

    partials = pl.pallas_call(
        kernel,
        out_shape=jax.ShapeDtypeStruct((1, num_cores * _LANES), jnp.float32),
        grid=(num_cores, tiles_per_core),
        in_specs=[
            pl.BlockSpec((tile_n, c), row_block),                  # logits tile
            pl.BlockSpec((tile_n, 1), row_block),                  # targets tile
            pl.BlockSpec((1, c), lambda cc, ii: (0, 0)),           # alpha (resident)
        ],
        out_specs=pl.BlockSpec((1, _LANES), lambda cc, ii: (0, cc)),   # per-core partial
        scratch_shapes=[pltpu.VMEM((1, _LANES), jnp.float32)],
        compiler_params=pltpu.CompilerParams(
            dimension_semantics=("parallel", "arbitrary"),
            vmem_limit_bytes=int(vmem_budget),
        ),
        cost_estimate=cost,
    )(logits, targets2d, alpha2d)

    per_core = partials.reshape(num_cores, _LANES)[:, 0]
    return jnp.sum(per_core) * (1.0 / n)


def focal_loss_ref(logits, targets, alpha=None, gamma=2.0):
    """Pure-JAX reference mirroring the PyTorch module."""
    logp = jax.nn.log_softmax(logits.astype(jnp.float32), axis=-1)
    ce = -jnp.take_along_axis(logp, targets[:, None].astype(jnp.int32), axis=-1)[:, 0]
    pt = jnp.exp(-ce)
    fl = (1.0 - pt) ** gamma * ce
    if alpha is not None:
        fl = alpha[targets] * fl
    return jnp.mean(fl)


if __name__ == "__main__":
    key = jax.random.PRNGKey(0)
    k_logits, k_targets = jax.random.split(key)

    # Small shapes consistent with the module: batch=20 (not a tile multiple, to
    # exercise padded-row masking), classes=16.
    N, C = 20, 16
    logits = jax.random.normal(k_logits, (N, C), dtype=jnp.float32)
    targets = jax.random.randint(k_targets, (N,), 0, C, dtype=jnp.int32)
    alpha = (jnp.arange(C, dtype=jnp.float32) + 1.0) / C   # per-class weights
    gamma = 2.0

    ref = focal_loss_ref(logits, targets, alpha, gamma)

    # 1) Multi-tile, explicit 2-way core split (grid (2,2); exercises the phantom-block
    #    clamp + masked partial tile). Correct on single-core chips too (serial loop).
    out_split = jax.block_until_ready(
        focal_loss(logits, targets, alpha, gamma, tile_n=8, num_cores=2))
    assert jnp.allclose(out_split, ref, atol=1e-5, rtol=1e-4), (out_split, ref)

    # 2) Default auto path (byte-sized tile, auto core count).
    out_auto = jax.block_until_ready(focal_loss(logits, targets, alpha, gamma))
    assert jnp.allclose(out_auto, ref, atol=1e-5, rtol=1e-4), (out_auto, ref)

    # 3) bf16 logits stay bf16 in HBM; kernel upcasts per tile in VMEM.
    logits_bf16 = logits.astype(jnp.bfloat16)
    ref_bf16 = focal_loss_ref(logits_bf16.astype(jnp.float32), targets, alpha, gamma)
    out_bf16 = jax.block_until_ready(focal_loss(logits_bf16, targets, alpha, gamma))
    assert jnp.allclose(out_bf16, ref_bf16, atol=1e-3, rtol=1e-3), (out_bf16, ref_bf16)

    # 4) alpha=None (module default) on the single-core multi-tile masked path.
    ref_na = focal_loss_ref(logits, targets, None, gamma)
    out_na = jax.block_until_ready(
        focal_loss(logits, targets, None, gamma, tile_n=8, num_cores=1))
    assert jnp.allclose(out_na, ref_na, atol=1e-5, rtol=1e-4), (out_na, ref_na)

    print("KERNEL_OK")
</pallas_src>

<mosaic_0001>
module attributes {stable_mosaic.version = 11 : i64} {
  func.func @_focal_loss_kernel(%arg0: i32, %arg1: i32, %arg2: memref<8x16xf32, #tpu.memory_space<vmem>>, %arg3: memref<8x1xi32, #tpu.memory_space<vmem>>, %arg4: memref<1x16xf32, #tpu.memory_space<vmem>>, %arg5: memref<1x128xf32, #tpu.memory_space<vmem>>, %arg6: memref<1x128xf32, #tpu.memory_space<vmem>>) attributes {dimension_semantics = [#tpu.dimension_semantics<parallel>, #tpu.dimension_semantics<arbitrary>], iteration_bounds = array<i64: 2, 2>, scalar_prefetch = 0 : i64, scratch_operands = 1 : i64, tpu.core_type = #tpu.core_type<tc>, window_params = [{transform_indices = @transform_0, window_bounds = array<i64: 8, 16>}, {transform_indices = @transform_1, window_bounds = array<i64: 8, 1>}, {pipeline_mode = #tpu.pipeline_mode<synchronous>, transform_indices = @transform_2, window_bounds = array<i64: 1, 16>}, {transform_indices = @transform_3, window_bounds = array<i64: 1, 128>}]} {
    %c0_i32 = arith.constant 0 : i32
    %0 = arith.cmpi eq, %arg1, %c0_i32 : i32
    %1 = arith.extui %0 : i1 to i32
    %c0_i32_0 = arith.constant 0 : i32
    %2 = arith.cmpi ne, %1, %c0_i32_0 : i32
    scf.if %2 {
      %cst_18 = arith.constant 0.000000e+00 : f32
      %52 = vector.broadcast %cst_18 : f32 to vector<1x128xf32>
      %c0_19 = arith.constant 0 : index
      %c0_20 = arith.constant 0 : index
      %53 = vector.load %arg6[%c0_19, %c0_20] : memref<1x128xf32, #tpu.memory_space<vmem>>, vector<1x128xf32>
      tpu.vector_store %arg6[%c0_19, %c0_20], %52 {strides = array<i32>} : memref<1x128xf32, #tpu.memory_space<vmem>>, vector<1x128xf32>,
    } else {
    }
    %c0 = arith.constant 0 : index
    %c0_1 = arith.constant 0 : index
    %3 = vector.load %arg2[%c0, %c0_1] : memref<8x16xf32, #tpu.memory_space<vmem>>, vector<8x16xf32>
    %c0_2 = arith.constant 0 : index
    %c0_3 = arith.constant 0 : index
    %4 = vector.load %arg3[%c0_2, %c0_3] : memref<8x1xi32, #tpu.memory_space<vmem>>, vector<8x1xi32>
    %c0_4 = arith.constant 0 : index
    %c0_5 = arith.constant 0 : index
    %5 = vector.load %arg4[%c0_4, %c0_5] : memref<1x16xf32, #tpu.memory_space<vmem>>, vector<1x16xf32>
    %cst = arith.constant dense<0xFF800000> : vector<8xf32>
    %6 = vector.multi_reduction <maximumf>, %3, %cst [1] : vector<8x16xf32> to vector<8xf32>
    %7 = vector.shape_cast %6 : vector<8xf32> to vector<8x1xf32>
    %8 = vector.broadcast %7 : vector<8x1xf32> to vector<8x16xf32>
    %9 = arith.subf %3, %8 : vector<8x16xf32>
    %10 = math.exp %9 : vector<8x16xf32>
    %cst_6 = arith.constant dense<0.000000e+00> : vector<8xf32>
    %11 = vector.multi_reduction <add>, %10, %cst_6 [1] : vector<8x16xf32> to vector<8xf32>
    %12 = vector.shape_cast %11 : vector<8xf32> to vector<8x1xf32>
    %13 = math.log %12 : vector<8x1xf32>
    %14 = tpu.iota {dimensions = array<i32: 1>} : vector<8x16xi32>
    %15 = vector.broadcast %4 : vector<8x1xi32> to vector<8x16xi32>
    %16 = arith.cmpi eq, %14, %15 : vector<8x16xi32>
    %cst_7 = arith.constant 0.000000e+00 : f32
    %17 = vector.broadcast %cst_7 : f32 to vector<8x16xf32>
    %18 = arith.select %16, %3, %17 : vector<8x16xi1>, vector<8x16xf32>
    %cst_8 = arith.constant dense<0.000000e+00> : vector<8xf32>
    %19 = vector.multi_reduction <add>, %18, %cst_8 [1] : vector<8x16xf32> to vector<8xf32>
    %20 = vector.shape_cast %19 : vector<8xf32> to vector<8x1xf32>
    %cst_9 = arith.constant 0.000000e+00 : f32
    %21 = vector.shape_cast %5 : vector<1x16xf32> to vector<1x16xf32>
    %22 = vector.broadcast %21 : vector<1x16xf32> to vector<8x16xf32>
    %23 = vector.broadcast %cst_9 : f32 to vector<8x16xf32>
    %24 = arith.select %16, %22, %23 : vector<8x16xi1>, vector<8x16xf32>
    %cst_10 = arith.constant dense<0.000000e+00> : vector<8xf32>
    %25 = vector.multi_reduction <add>, %24, %cst_10 [1] : vector<8x16xf32> to vector<8xf32>
    %26 = vector.shape_cast %25 : vector<8xf32> to vector<8x1xf32>
    %27 = arith.addf %7, %13 : vector<8x1xf32>
    %28 = arith.subf %27, %20 : vector<8x1xf32>
    %cst_11 = arith.constant 0.000000e+00 : f32
    %29 = vector.broadcast %cst_11 : f32 to vector<8x1xf32>
    %30 = arith.subf %29, %28 : vector<8x1xf32>
    %31 = math.exp %30 : vector<8x1xf32>
    %cst_12 = arith.constant 1.000000e+00 : f32
    %32 = vector.broadcast %cst_12 : f32 to vector<8x1xf32>
    %33 = arith.subf %32, %31 : vector<8x1xf32>
    %cst_13 = arith.constant 0.000000e+00 : f32
    %34 = vector.broadcast %cst_13 : f32 to vector<8x1xf32>
    %35 = arith.maximumf %33, %34 : vector<8x1xf32>
    %36 = arith.mulf %35, %35 : vector<8x1xf32>
    %37 = arith.mulf %36, %28 : vector<8x1xf32>
    %38 = arith.mulf %26, %37 : vector<8x1xf32>
    %c2_i32 = arith.constant 2 : i32
    %39 = arith.muli %arg0, %c2_i32 : i32
    %40 = arith.addi %39, %arg1 : i32
    %c8_i32 = arith.constant 8 : i32
    %41 = arith.muli %40, %c8_i32 : i32
    %c8_i32_14 = arith.constant 8 : i32
    %42 = arith.addi %41, %c8_i32_14 : i32
    %c20_i32 = arith.constant 20 : i32
    %43 = arith.cmpi sle, %42, %c20_i32 : i32
    %44 = arith.extui %43 : i1 to i32
    %c0_i32_15 = arith.constant 0 : i32
    %45 = arith.cmpi ne, %44, %c0_i32_15 : i32
    scf.if %45 {
      %c0_18 = arith.constant 0 : index
      %c0_19 = arith.constant 0 : index
      %52 = vector.load %arg6[%c0_18, %c0_19] : memref<1x128xf32, #tpu.memory_space<vmem>>, vector<1x128xf32>
      %53 = vector.shape_cast %38 : vector<8x1xf32> to vector<1x8x1xf32>
      %cst_20 = arith.constant dense<0.000000e+00> : vector<1xf32>
      %54 = vector.multi_reduction <add>, %53, %cst_20 [1, 2] : vector<1x8x1xf32> to vector<1xf32>
      %55 = vector.shape_cast %54 : vector<1xf32> to vector<1x1x1xf32>
      %56 = vector.extract %55[0, 0, 0] : f32 from vector<1x1x1xf32>
      %57 = vector.broadcast %56 : f32 to vector<1x128xf32>
      %58 = arith.addf %52, %57 : vector<1x128xf32>
      %c0_21 = arith.constant 0 : index
      %c0_22 = arith.constant 0 : index
      %59 = vector.load %arg6[%c0_21, %c0_22] : memref<1x128xf32, #tpu.memory_space<vmem>>, vector<1x128xf32>
      tpu.vector_store %arg6[%c0_21, %c0_22], %58 {strides = array<i32>} : memref<1x128xf32, #tpu.memory_space<vmem>>, vector<1x128xf32>,
    } else {
    }
    %true = arith.constant true
    %46 = arith.xori %43, %true : i1
    %47 = arith.extui %46 : i1 to i32
    %c0_i32_16 = arith.constant 0 : i32
    %48 = arith.cmpi ne, %47, %c0_i32_16 : i32
    scf.if %48 {
      %52 = tpu.iota {dimensions = array<i32: 0>} : vector<8x1xi32>
      %53 = vector.broadcast %41 : i32 to vector<8x1xi32>
      %54 = arith.addi %53, %52 : vector<8x1xi32>
      %c20_i32_18 = arith.constant 20 : i32
      %55 = vector.broadcast %c20_i32_18 : i32 to vector<8x1xi32>
      %56 = arith.cmpi slt, %54, %55 : vector<8x1xi32>
      %c0_19 = arith.constant 0 : index
      %c0_20 = arith.constant 0 : index
      %57 = vector.load %arg6[%c0_19, %c0_20] : memref<1x128xf32, #tpu.memory_space<vmem>>, vector<1x128xf32>
      %cst_21 = arith.constant 0.000000e+00 : f32
      %58 = vector.broadcast %cst_21 : f32 to vector<8x1xf32>
      %59 = arith.select %56, %38, %58 : vector<8x1xi1>, vector<8x1xf32>
      %60 = vector.shape_cast %59 : vector<8x1xf32> to vector<1x8x1xf32>
      %cst_22 = arith.constant dense<0.000000e+00> : vector<1xf32>
      %61 = vector.multi_reduction <add>, %60, %cst_22 [1, 2] : vector<1x8x1xf32> to vector<1xf32>
      %62 = vector.shape_cast %61 : vector<1xf32> to vector<1x1x1xf32>
      %63 = vector.extract %62[0, 0, 0] : f32 from vector<1x1x1xf32>
      %64 = vector.broadcast %63 : f32 to vector<1x128xf32>
      %65 = arith.addf %57, %64 : vector<1x128xf32>
      %c0_23 = arith.constant 0 : index
      %c0_24 = arith.constant 0 : index
      %66 = vector.load %arg6[%c0_23, %c0_24] : memref<1x128xf32, #tpu.memory_space<vmem>>, vector<1x128xf32>
      tpu.vector_store %arg6[%c0_23, %c0_24], %65 {strides = array<i32>} : memref<1x128xf32, #tpu.memory_space<vmem>>, vector<1x128xf32>,
    } else {
    }
    %c1_i32 = arith.constant 1 : i32
    %49 = arith.cmpi eq, %arg1, %c1_i32 : i32
    %50 = arith.extui %49 : i1 to i32
    %c0_i32_17 = arith.constant 0 : i32
    %51 = arith.cmpi ne, %50, %c0_i32_17 : i32
    scf.if %51 {
      %c0_18 = arith.constant 0 : index
      %c0_19 = arith.constant 0 : index
      %52 = vector.load %arg6[%c0_18, %c0_19] : memref<1x128xf32, #tpu.memory_space<vmem>>, vector<1x128xf32>
      %c0_20 = arith.constant 0 : index
      %c0_21 = arith.constant 0 : index
      %53 = vector.load %arg5[%c0_20, %c0_21] : memref<1x128xf32, #tpu.memory_space<vmem>>, vector<1x128xf32>
      tpu.vector_store %arg5[%c0_20, %c0_21], %52 {strides = array<i32>} : memref<1x128xf32, #tpu.memory_space<vmem>>, vector<1x128xf32>,
    } else {
    }
    return
  }
  func.func @transform_0(%arg0: i32, %arg1: i32) -> (i32, i32) {
    %c2_i32 = arith.constant 2 : i32
    %0 = arith.muli %arg0, %c2_i32 : i32
    %1 = arith.addi %0, %arg1 : i32
    %c2_i32_0 = arith.constant 2 : i32
    %2 = arith.minsi %1, %c2_i32_0 : i32
    %c0_i32 = arith.constant 0 : i32
    %c0_i32_1 = arith.constant 0 : i32
    return %2, %c0_i32 : i32, i32
  }
  func.func @transform_1(%arg0: i32, %arg1: i32) -> (i32, i32) {
    %c2_i32 = arith.constant 2 : i32
    %0 = arith.muli %arg0, %c2_i32 : i32
    %1 = arith.addi %0, %arg1 : i32
    %c2_i32_0 = arith.constant 2 : i32
    %2 = arith.minsi %1, %c2_i32_0 : i32
    %c0_i32 = arith.constant 0 : i32
    %c0_i32_1 = arith.constant 0 : i32
    return %2, %c0_i32 : i32, i32
  }
  func.func @transform_2(%arg0: i32, %arg1: i32) -> (i32, i32) {
    %c0_i32 = arith.constant 0 : i32
    %c0_i32_0 = arith.constant 0 : i32
    %c0_i32_1 = arith.constant 0 : i32
    return %c0_i32, %c0_i32_0 : i32, i32
  }
  func.func @transform_3(%arg0: i32, %arg1: i32) -> (i32, i32) {
    %c0_i32 = arith.constant 0 : i32
    %c0_i32_0 = arith.constant 0 : i32
    return %c0_i32, %arg0 : i32, i32
  }
}

</mosaic_0001>

<llo_original>
// kernel: tpu_custom_call.1
$region0: #{tpu_custom_call.1}
  #allocation0 [shape = 'u32[]', space=smem, size = 0x4, offset = 0x4, fixed_abs, tag = 'smem constant byte address 0x4 - core index']
  #allocation1 [shape = 'u32[144,128]{1,0:T(1,128)}', space=vmem, size = 0x12000, scoped, tag = 'internal scratch']
  #allocation2 [shape = 'f32[1,128]{1,0:T(1,128)}', space=vmem, size = 0x200, scoped, tag = 'scratch operand']
  %s0 = inlined_call_operand.vmem [shape: f32[20,16], index: 0, kind: input, shape index: {}]
  %s1 = inlined_call_operand.vmem [shape: s32[20,1], index: 1, kind: input, shape index: {}]
  %s2 = inlined_call_operand.vmem [shape: f32[1,16], index: 2, kind: input, shape index: {}]
  %s3 = inlined_call_operand.hbm [shape: f32[1,256], index: 3, kind: output, shape index: {}]
  %s4 = sld [smem:[#allocation0]]
  $region61: #{tpu_custom_call.1} parent=0
    _
  %s6 = ssub.s32 1, %s4
  %s7 = scalar_select 0, %s6, %s4
  $region1: #{tpu_custom_call.1} parent=0
    #allocation3 [shape = 'u8[1024]{0}', space=vmem, size = 0x400, scoped, tag = 'output window, operand 0']
    #allocation4 [shape = 's32[2]{0}', space=sflag, size = 0x8, scoped, tag = 'scoped memory for tpu_custom_call.1']
    %8 = vsyncpa [#allocation4], 0
    %s9 = scalar_lea.sflag [#allocation4], 1
    %10 = vsyncpa %s9, 0
    loop: start=0, step=1, limit=6
    $region2: #{tpu_custom_call.1} parent=1 // loop_pre_header
      _
    $region3: #{tpu_custom_call.1} parent=1 // loop_header
      %s12 = sphi 0, %s16
      %p13 = scmp.ge.s32.totalorder %s12, 6
      %s19 = sphi 0, %s31
      %s20 = sphi 0, %s27
      %s21 = sphi 0, %s19
      %s22 = sphi 0, %s20
      %s23 = sphi 0, %s21
      %s24 = sphi 0, %s22
      %s42 = sphi 0, %s44
      %s45 = sphi 0, %s42
      %s46 = sphi 0, %s45
      %s62 = sphi 0, %s46
      %s76 = sphi 0, %s78
      %s79 = sphi 0, %s76
      %s80 = sphi 0, %s79
      %s96 = sphi 0, %s80
      %s100 = sphi 0, %s100
      %s102 = sphi 0, %s100
      %s103 = sphi 0, %s102
      %s117 = sphi 0, %s103
      %s123 = sphi 0, %s125
      %s126 = sphi 0, %s123
      %s127 = sphi 0, %s126
      %s143 = sphi 0, %s127
    $region4: #{tpu_custom_call.1} parent=1 // loop_header_branch
      %15 = sbr.rel (%p13) target = $region8
    $region5: #{tpu_custom_call.1} parent=1 // loop_body
      %s17 = ssub.s32 %s12, 1
      %s18 = ssub.s32 %s12, 2
      %s25 = sadd.s32 1, %s20
      %p26 = scmp.ge.s32.totalorder %s25, 2
      %s27 = scalar_select %p26, 0, %s25
      %s28 = sadd.s32 1, %s19
      %s29 = scalar_select %p26, %s28, %s19
      %p30 = scmp.ge.s32.totalorder %s29, 2
      %s31 = scalar_select %p30, 0, %s29
      %s32 = smul.u32 %s19, 2
      %s33 = sadd.s32 %s32, %s20
      %p34 = scmp.lt.s32.totalorder %s33, 2
      %s35 = scalar_select %p34, %s33, 2
      %s36 = smul.u32 %s31, 2
      %s37 = sadd.s32 %s36, %s27
      %p38 = scmp.lt.s32.totalorder %s37, 2
      %s39 = scalar_select %p38, %s37, 2
      %s40 = ssub.s32 %s35, %s39
      %p41 = scmp.eq.s32.totalorder %s40, 0
      %s43 = sadd.s32 %s42, 1
      %s44 = scalar_select %p41, %s42, %s43
      %p47 = pneg %p41
      %p48 = scmp.eq.s32.totalorder %s12, 3
      %p49 = por %p47, %p48
      %p50 = scmp.ne.s32.totalorder %s42, %s45
      %p51 = scmp.eq.s32.totalorder %s12, 0
      %p52 = por %p50, %p51
      %p53 = scmp.ne.s32.totalorder %s42, %s45
      %p54 = scmp.eq.s32.totalorder %s17, 3
      %p55 = por %p53, %p54
      %p56 = scmp.ne.s32.totalorder %s45, %s46
      %p57 = scmp.eq.s32.totalorder %s17, 0
      %p58 = por %p56, %p57
      %p59 = scmp.ne.s32.totalorder %s45, %s46
      %p60 = scmp.eq.s32.totalorder %s18, 3
      %p61 = por %p59, %p60
      %p63 = scmp.ne.s32.totalorder %s46, %s62
      %p64 = scmp.eq.s32.totalorder %s18, 0
      %p65 = por %p63, %p64
      %s66 = smul.u32 %s19, 2
      %s67 = sadd.s32 %s66, %s20
      %p68 = scmp.lt.s32.totalorder %s67, 2
      %s69 = scalar_select %p68, %s67, 2
      %s70 = smul.u32 %s31, 2
      %s71 = sadd.s32 %s70, %s27
      %p72 = scmp.lt.s32.totalorder %s71, 2
      %s73 = scalar_select %p72, %s71, 2
      %s74 = ssub.s32 %s69, %s73
      %p75 = scmp.eq.s32.totalorder %s74, 0
      %s77 = sadd.s32 %s76, 1
      %s78 = scalar_select %p75, %s76, %s77
      %p81 = pneg %p75
      %p82 = scmp.eq.s32.totalorder %s12, 3
      %p83 = por %p81, %p82
      %p84 = scmp.ne.s32.totalorder %s76, %s79
      %p85 = scmp.eq.s32.totalorder %s12, 0
      %p86 = por %p84, %p85
      %p87 = scmp.ne.s32.totalorder %s76, %s79
      %p88 = scmp.eq.s32.totalorder %s17, 3
      %p89 = por %p87, %p88
      %p90 = scmp.ne.s32.totalorder %s79, %s80
      %p91 = scmp.eq.s32.totalorder %s17, 0
      %p92 = por %p90, %p91
      %p93 = scmp.ne.s32.totalorder %s79, %s80
      %p94 = scmp.eq.s32.totalorder %s18, 3
      %p95 = por %p93, %p94
      %p97 = scmp.ne.s32.totalorder %s80, %s96
      %p98 = scmp.eq.s32.totalorder %s18, 0
      %p99 = por %p97, %p98
      %s101 = sadd.s32 %s100, 1
      %p104 = scmp.eq.s32.totalorder %s12, 3
      %p105 = scmp.ne.s32.totalorder %s100, %s102
      %p106 = scmp.eq.s32.totalorder %s12, 0
      %p107 = por %p105, %p106
      %p108 = scmp.ne.s32.totalorder %s100, %s102
      %p109 = scmp.eq.s32.totalorder %s17, 3
      %p110 = por %p108, %p109
      %p111 = scmp.ne.s32.totalorder %s102, %s103
      %p112 = scmp.eq.s32.totalorder %s17, 0
      %p113 = por %p111, %p112
      %p114 = scmp.ne.s32.totalorder %s102, %s103
      %p115 = scmp.eq.s32.totalorder %s18, 3
      %p116 = por %p114, %p115
      %p118 = scmp.ne.s32.totalorder %s103, %s117
      %p119 = scmp.eq.s32.totalorder %s18, 0
      %p120 = por %p118, %p119
      %s121 = ssub.s32 %s19, %s31
      %p122 = scmp.eq.s32.totalorder %s121, 0
      %s124 = sadd.s32 %s123, 1
      %s125 = scalar_select %p122, %s123, %s124
      %p128 = pneg %p122
      %p129 = scmp.eq.s32.totalorder %s12, 3
      %p130 = por %p128, %p129
      %p131 = scmp.ne.s32.totalorder %s123, %s126
      %p132 = scmp.eq.s32.totalorder %s12, 0
      %p133 = por %p131, %p132
      %p134 = scmp.ne.s32.totalorder %s123, %s126
      %p135 = scmp.eq.s32.totalorder %s17, 3
      %p136 = por %p134, %p135
      %p137 = scmp.ne.s32.totalorder %s126, %s127
      %p138 = scmp.eq.s32.totalorder %s17, 0
      %p139 = por %p137, %p138
      %p140 = scmp.ne.s32.totalorder %s126, %s127
      %p141 = scmp.eq.s32.totalorder %s18, 3
      %p142 = por %p140, %p141
      %p144 = scmp.ne.s32.totalorder %s127, %s143
      %p145 = scmp.eq.s32.totalorder %s18, 0
      %p146 = por %p144, %p145
      %p147 = scmp.le.s32.totalorder 1, %s12
      %p148 = scmp.lt.s32.totalorder %s12, 5
      %p149 = pnand %p147, %p148
      %p150 = pneg %p149
      // Predicated region
      $region9: #{tpu_custom_call.1} parent=5 // pred_check
        _
      $region10: #{tpu_custom_call.1} parent=5 // pred_check_branch
        %152 = sbr.rel (%p149) target = $region12
      $region11: #{tpu_custom_call.1} parent=5 // pred_region
        %s153 = ssub.s32 %s12, 1
        // Predicated region
        $region13: #{tpu_custom_call.1} parent=11 // pred_check
          %p154 = pneg %p113
        $region14: #{tpu_custom_call.1} parent=11 // pred_check_branch
          %156 = sbr.rel (%p154) target = $region16
        $region15: #{tpu_custom_call.1} parent=11 // pred_region
          _
        $region16: #{tpu_custom_call.1} parent=11 // pred_fallthru
          _
      $region12: #{tpu_custom_call.1} parent=5 // pred_fallthru
        _
      %p157 = scmp.lt.s32.totalorder %s12, 4
      // Predicated region
      $region17: #{tpu_custom_call.1} parent=5 // pred_check
        %p158 = pneg %p157
      $region18: #{tpu_custom_call.1} parent=5 // pred_check_branch
        %160 = sbr.rel (%p158) target = $region20
      $region19: #{tpu_custom_call.1} parent=5 // pred_region
        // Predicated region
        $region21: #{tpu_custom_call.1} parent=19 // pred_check
          %p161 = pneg %p52
        $region22: #{tpu_custom_call.1} parent=19 // pred_check_branch
          %163 = sbr.rel (%p161) target = $region24
        $region23: #{tpu_custom_call.1} parent=19 // pred_region
          %s164 = smul.u32 %s19, 2
          %s165 = sadd.s32 %s164, %s20
          %p166 = scmp.lt.s32.totalorder %s165, 2
          %s167 = scalar_select %p166, %s165, 2
          %p168 = scmp.lt.s32.totalorder %s167, 2
          %s169 = scalar_select %p168, %s167, 2
          %s170 = smul.addr %s169, 8
          %s171 = scalar_lea.vmem %s0, %s170
          %s172 = smul.u32 %s19, 2
          %s173 = sadd.s32 %s172, %s20
          %p174 = scmp.lt.s32.totalorder %s173, 2
          %s175 = scalar_select %p174, %s173, 2
        $region24: #{tpu_custom_call.1} parent=19 // pred_fallthru
          _
        // Predicated region
        $region25: #{tpu_custom_call.1} parent=19 // pred_check
          %p176 = pneg %p86
        $region26: #{tpu_custom_call.1} parent=19 // pred_check_branch
          %178 = sbr.rel (%p176) target = $region28
        $region27: #{tpu_custom_call.1} parent=19 // pred_region
          %s179 = smul.u32 %s19, 2
          %s180 = sadd.s32 %s179, %s20
          %p181 = scmp.lt.s32.totalorder %s180, 2
          %s182 = scalar_select %p181, %s180, 2
          %p183 = scmp.lt.s32.totalorder %s182, 2
          %s184 = scalar_select %p183, %s182, 2
          %s185 = smul.addr %s184, 8
          %s186 = scalar_lea.vmem %s1, %s185
          %s187 = smul.u32 %s19, 2
          %s188 = sadd.s32 %s187, %s20
          %p189 = scmp.lt.s32.totalorder %s188, 2
          %s190 = scalar_select %p189, %s188, 2
        $region28: #{tpu_custom_call.1} parent=19 // pred_fallthru
          _
      $region20: #{tpu_custom_call.1} parent=5 // pred_fallthru
        _
      %p191 = scmp.le.s32.totalorder 1, %s12
      %p192 = scmp.lt.s32.totalorder %s12, 5
      %p193 = pnand %p191, %p192
      %p194 = pneg %p193
      // Predicated region
      $region29: #{tpu_custom_call.1} parent=5 // pred_check
        _
      $region30: #{tpu_custom_call.1} parent=5 // pred_check_branch
        %196 = sbr.rel (%p193) target = $region32
      $region31: #{tpu_custom_call.1} parent=5 // pred_region
        %s197 = ssub.s32 %s12, 1
        %s198 = smul.u32 %s21, 2
        %s199 = sadd.s32 %s198, %s22
        %p200 = scmp.lt.s32.totalorder %s199, 2
        %s201 = scalar_select %p200, %s199, 2
        %p202 = scmp.lt.s32.totalorder %s201, 2
        %s203 = scalar_select %p202, %s201, 2
        %s204 = smul.addr %s203, 8
        %s205 = scalar_lea.vmem %s0, %s204
        %p206 = pneg %p58
        %p207 = pneg %p55
        %s208 = smul.u32 %s21, 2
        %s209 = sadd.s32 %s208, %s22
        %p210 = scmp.lt.s32.totalorder %s209, 2
        %s211 = scalar_select %p210, %s209, 2
        %p212 = scmp.lt.s32.totalorder %s211, 2
        %s213 = scalar_select %p212, %s211, 2
        %s214 = smul.addr %s213, 8
        %s215 = scalar_lea.vmem %s1, %s214
        %p216 = pneg %p92
        %p217 = pneg %p89
        %p218 = pneg %p113
        %p219 = pneg %p110
        %p220 = pneg %p139
        %p221 = pneg %p136
        %s222 = sand.u32 %s126, 1
        %s223 = scalar_lea.sflag [#allocation4], %s222
        %s224 = sand.u32 %s126, 1
        %s225 = scalar_lea.vmem [#allocation3], %s224
        %s226 = smul.u32 %s21, 2
        %s227 = sadd.s32 %s226, %s22
        %p228 = scmp.lt.s32.totalorder %s227, 2
        %s229 = scalar_select %p228, %s227, 2
        %p230 = scmp.lt.s32.totalorder %s229, 2
        %s231 = scalar_select %p230, %s229, 2
        %s232 = smul.addr %s231, 8
        %s233 = scalar_lea.vmem %s0, %s232
        %s234 = smul.u32 %s21, 2
        %s235 = sadd.s32 %s234, %s22
        %p236 = scmp.lt.s32.totalorder %s235, 2
        %s237 = scalar_select %p236, %s235, 2
        %s238 = smul.u32 %s21, 2
        %s239 = sadd.s32 %s238, %s22
        %p240 = scmp.lt.s32.totalorder %s239, 2
        %s241 = scalar_select %p240, %s239, 2
        %p242 = scmp.lt.s32.totalorder %s241, 2
        %s243 = scalar_select %p242, %s241, 2
        %s244 = smul.addr %s243, 8
        %s245 = scalar_lea.vmem %s1, %s244
        %s246 = smul.u32 %s21, 2
        %s247 = sadd.s32 %s246, %s22
        %p248 = scmp.lt.s32.totalorder %s247, 2
        %s249 = scalar_select %p248, %s247, 2
        %p250 = scmp.eq.s32.totalorder %s22, 0
        // Predicated region
        $region33: #{tpu_custom_call.1} parent=31 // pred_check
          %p251 = pneg %p250
        $region34: #{tpu_custom_call.1} parent=31 // pred_check_branch
          %253 = sbr.rel (%p251) target = $region36
        $region35: #{tpu_custom_call.1} parent=31 // pred_region
          %254 = vst [vmem:[#allocation2] sm:$0x1] 0.0
        $region36: #{tpu_custom_call.1} parent=31 // pred_fallthru
          _
        %v255 = vld [vmem:[%s233] sm:$0xff]
        %v256 = vld [vmem:[%s245] sm:$0xff]
        %v257 = vld [vmem:[%s2] sm:$0x1]
        %vm258 = vcmask 130048
        %v259 = vsel %vm258, %v255, -inf
        %260 = vmax.xlane.f32.xlu0 %v259
        %v261 = vpop.xlane.xlu0 %260
        %v262 = vsub.f32 %v255, %v261
        %v263 = vmul.f32 %v262, 1.442695
        %v264 = vpow.pop %v263
        %v265 = vsel %vm258, %v264, 0.0
        %266 = vadd.xlane.f32.xlu0 %v265
        %v267 = vpop.xlane.xlu0 %266
        %v268 = vlog2.pop %v267
        %v269 = vmul.f32 %v268, 0.6931472
        %v270 = vlaneseq
        %v271 = vand.u32 %v270, 127
        %272 = vset.pattern.permute.xlu0 0
        %273 = vperm.xlu0 %272, %v256
        %v274 = vpop.permute.xlu0 %273
        %vm275 = vcmp.eq.s32.totalorder %v271, %v274
        %v276 = vsel %vm275, %v255, 0.0
        %v277 = vsel %vm258, %v276, 0.0
        %278 = vadd.xlane.f32.xlu0 %v277
        %v279 = vpop.xlane.xlu0 %278
        %v281 = vlaneseq
        %v282 = vshrl.u32 %v281, 7
        %v283 = vsub.s32 0, %v282
        %v284 = vrot.slane %v257, %v283
        %v286 = vsel %vm275, %v284, 0.0
        %v287 = vsel %vm258, %v286, 0.0
        %288 = vadd.xlane.f32.xlu0 %v287
        %v289 = vpop.xlane.xlu0 %288
        %v290 = vadd.f32 %v261, %v269
        %v291 = vsub.f32 %v290, %v279
        %v292 = vsub.f32 0.0, %v291
        %v293 = vmul.f32 %v292, 1.442695
        %v294 = vpow.pop %v293
        %v295 = vsub.f32 1.0, %v294
        %v296 = vmax.f32 %v295, 0.0
        %v297 = vmul.f32 %v296, %v296
        %v298 = vmul.f32 %v297, %v291
        %v299 = vmul.f32 %v289, %v298
        %s300 = smul.u32 %s21, 2
        %s301 = sadd.s32 %s300, %s22
        %s302 = smul.u32 %s301, 8
        %s303 = sadd.s32 %s302, 8
        %p304 = scmp.le.s32.totalorder %s303, 20
        // Predicated region
        $region37: #{tpu_custom_call.1} parent=31 // pred_check
          %p305 = pneg %p304
        $region38: #{tpu_custom_call.1} parent=31 // pred_check_branch
          %307 = sbr.rel (%p305) target = $region40
        $region39: #{tpu_custom_call.1} parent=31 // pred_region
          %v308 = vld [vmem:[#allocation2] sm:$0x1]
          %vm309 = vcmask 7168
          %v310 = vsel %vm309, %v299, 0.0
          %311 = vadd.xlane.f32.xlu0 %v310
          %v312 = vpop.xlane.xlu0 %311
          %v313 = vrot.slane %v312, 4
          %v314 = vadd.f32 %v312, %v313
          %v315 = vrot.slane %v314, 2
          %v316 = vadd.f32 %v314, %v315
          %v317 = vrot.slane %v316, 1
          %v318 = vadd.f32 %v316, %v317
          %s319 = vtos %v318
          %v320 = vstv %s319
          %v321 = vadd.f32 %v308, %v320
          %322 = vst [vmem:[#allocation2] sm:$0x1] %v321
        $region40: #{tpu_custom_call.1} parent=31 // pred_fallthru
          _
        %p323 = scmp.gt.s32.totalorder %s303, 20
        // Predicated region
        $region41: #{tpu_custom_call.1} parent=31 // pred_check
          %p324 = pneg %p323
        $region42: #{tpu_custom_call.1} parent=31 // pred_check_branch
          %326 = sbr.rel (%p324) target = $region44
        $region43: #{tpu_custom_call.1} parent=31 // pred_region
          %v327 = vlaneseq
          %v328 = vshrl.u32 %v327, 7
          %v329 = vstv %s302
          %v330 = vadd.s32 %v329, %v328
          %vm331 = vcmp.lt.s32.totalorder %v330, 20
          %v332 = vld [vmem:[#allocation2] sm:$0x1]
          %v333 = vsel %vm331, %v299, 0.0
          %vm334 = vcmask 7168
          %v335 = vsel %vm334, %v333, 0.0
          %336 = vadd.xlane.f32.xlu0 %v335
          %v337 = vpop.xlane.xlu0 %336
          %v338 = vrot.slane %v337, 4
          %v339 = vadd.f32 %v337, %v338
          %v340 = vrot.slane %v339, 2
          %v341 = vadd.f32 %v339, %v340
          %v342 = vrot.slane %v341, 1
          %v343 = vadd.f32 %v341, %v342
          %s344 = vtos %v343
          %v345 = vstv %s344
          %v346 = vadd.f32 %v332, %v345
          %347 = vst [vmem:[#allocation2] sm:$0x1] %v346
        $region44: #{tpu_custom_call.1} parent=31 // pred_fallthru
          _
        %p348 = scmp.eq.s32.totalorder %s22, 1
        // Predicated region
        $region45: #{tpu_custom_call.1} parent=31 // pred_check
          %p349 = pneg %p348
        $region46: #{tpu_custom_call.1} parent=31 // pred_check_branch
          %351 = sbr.rel (%p349) target = $region48
        $region47: #{tpu_custom_call.1} parent=31 // pred_region
          %v352 = vld [vmem:[#allocation2] sm:$0x1]
          %353 = vst [vmem:[%s225] sm:$0x1] %v352
        $region48: #{tpu_custom_call.1} parent=31 // pred_fallthru
          _
        %s354 = sand.u32 %s126, 1
        %s355 = scalar_lea.sflag [#allocation4], %s354
        %s356 = sand.u32 %s126, 1
        %s357 = scalar_lea.vmem [#allocation3], %s356
        // Predicated region
        $region49: #{tpu_custom_call.1} parent=31 // pred_check
          %p358 = pneg %p136
        $region50: #{tpu_custom_call.1} parent=31 // pred_check_branch
          %360 = sbr.rel (%p358) target = $region52
        $region51: #{tpu_custom_call.1} parent=31 // pred_region
          %s362 = ssub.s32 16, 16
          %363 = vsyncadd %s355, %s362
          %s364 = smul.addr %s21, 16
          %s365 = scalar_lea.hbm %s3, %s364
          %s367 = sshll.u32 %s357, 4
          %s368 = int_to_ptr.vmem [resolvable:$true] %s367
          %370 = dma.vmem_to_hbm [thread:$0]  %s368, 16, %s365, %s355
        $region52: #{tpu_custom_call.1} parent=31 // pred_fallthru
          _
      $region32: #{tpu_custom_call.1} parent=5 // pred_fallthru
        _
      %p371 = scmp.le.s32.totalorder 2, %s12
      // Predicated region
      $region53: #{tpu_custom_call.1} parent=5 // pred_check
        %p372 = pneg %p371
      $region54: #{tpu_custom_call.1} parent=5 // pred_check_branch
        %374 = sbr.rel (%p372) target = $region56
      $region55: #{tpu_custom_call.1} parent=5 // pred_region
        %s375 = ssub.s32 %s12, 2
        // Predicated region
        $region57: #{tpu_custom_call.1} parent=55 // pred_check
          %p376 = pneg %p142
        $region58: #{tpu_custom_call.1} parent=55 // pred_check_branch
          %378 = sbr.rel (%p376) target = $region60
        $region59: #{tpu_custom_call.1} parent=55 // pred_region
          %s379 = sand.u32 %s127, 1
          %s380 = scalar_lea.sflag [#allocation4], %s379
          %s381 = sand.u32 %s127, 1
          %s382 = scalar_lea.vmem [#allocation3], %s381
          %383 = dma.done %s380, 16
        $region60: #{tpu_custom_call.1} parent=55 // pred_fallthru
          _
      $region56: #{tpu_custom_call.1} parent=5 // pred_fallthru
        _
    $region6: #{tpu_custom_call.1} parent=1 // loop_footer
      %s16 = sadd.s32 1, %s12
    $region7: #{tpu_custom_call.1} parent=1 // loop_footer_branch
      %11 = sbr.rel target = $region3
    $region8: #{tpu_custom_call.1} parent=1 // loop_exit
      _
    %384 = vsyncpa [#allocation4], 1
    %s385 = scalar_lea.sflag [#allocation4], 1
    %386 = vsyncpa %s385, 1

</llo_original>
